<compile_context>
chip_gen: v5e
topology: v5e:2x2
jax: 0.10.0
libtpu: 0.0.40
codegen_flags: <defaults>
</compile_context>

<pallas_src>
import functools

import jax
import jax.numpy as jnp
from jax.experimental import pallas as pl
from jax.experimental.pallas import tpu as pltpu

LN_EPS = 1e-5  # torch.nn.LayerNorm default


# ---------------------------------------------------------------------------
# helpers
# ---------------------------------------------------------------------------
def _round_up(n, m):
    return ((n + m - 1) // m) * m


def _pad2(a, rows, cols):
    r, c = a.shape
    if r == rows and c == cols:
        return a
    return jnp.pad(a, ((0, rows - r), (0, cols - c)))


# ---------------------------------------------------------------------------
# fused kernel body (num_layers / widths are static at trace time)
# ---------------------------------------------------------------------------
def _make_mlp_kernel(num_layers, hidden_real, p_h):
    """Ref layout: (x_ref, [w, vec] * num_layers, wf, bf, o_ref).

    vec is (3, p_h) f32 = [bias; gamma; beta]; w/wf are bf16.
    Padded weight/bias/gamma columns are zero, so padded activation columns of
    every matmul output are exactly zero.
    """
    inv_h = 1.0 / float(hidden_real)            # LN stats over the REAL width
    pad_corr = float(p_h - hidden_real) * inv_h  # (#padded cols) / hidden_real

    def kernel(x_ref, *refs):
        o_ref = refs[-1]
        h = x_ref[...].astype(jnp.float32)       # (tb, in_dims)

        # Static Python loop -> fully unrolled at trace time (layers is small).
        for l in range(num_layers):
            w_ref, v_ref = refs[2 * l], refs[2 * l + 1]
            # bf16 MXU operands, f32 accumulation.
            z = jnp.dot(h.astype(jnp.bfloat16), w_ref[...],
                        preferred_element_type=jnp.float32)
            z = z + v_ref[0:1, :]                # bias; padded cols stay 0

            # LayerNorm (f32), centered two-pass variance.  Padded z columns
            # are exactly 0, so sum(z) over all columns equals the real sum;
            # the centered squares pick up pad_count * mean^2, removed exactly
            # by the scalar correction below.
            mean = jnp.sum(z, axis=-1, keepdims=True) * inv_h
            zc = z - mean
            var = (jnp.sum(zc * zc, axis=-1, keepdims=True) * inv_h
                   - pad_corr * (mean * mean))
            zn = zc * jax.lax.rsqrt(var + LN_EPS)
            # gamma/beta are zero on padded cols -> padded cols return to 0.
            zn = zn * v_ref[1:2, :] + v_ref[2:3, :]
            # Dropout(p=0) is identity; ReLU:
            h = jnp.maximum(zn, 0.0)

        wf_ref, bf_ref = refs[2 * num_layers], refs[2 * num_layers + 1]
        o_ref[...] = (
            jnp.dot(h.astype(jnp.bfloat16), wf_ref[...],
                    preferred_element_type=jnp.float32)
            + bf_ref[...]
        )

    return kernel


# ---------------------------------------------------------------------------
# parameter init (mirrors PyTorch nn.Linear default U[-1/sqrt(fan_in), +])
# ---------------------------------------------------------------------------
def init_mlp_params(key, in_dims, out_dims, hidden_dims=32, layers=1):
    params = {"hidden": [], "final": None}
    d_in = in_dims
    for _ in range(layers):
        key, kw, kb = jax.random.split(key, 3)
        bound = 1.0 / float(d_in) ** 0.5
        w = jax.random.uniform(kw, (d_in, hidden_dims), jnp.float32, -bound, bound)
        b = jax.random.uniform(kb, (1, hidden_dims), jnp.float32, -bound, bound)
        gamma = jnp.ones((1, hidden_dims), jnp.float32)
        beta = jnp.zeros((1, hidden_dims), jnp.float32)
        params["hidden"].append((w, b, gamma, beta))
        d_in = hidden_dims
    key, kw, kb = jax.random.split(key, 3)
    bound = 1.0 / float(hidden_dims) ** 0.5
    wf = jax.random.uniform(kw, (hidden_dims, out_dims), jnp.float32, -bound, bound)
    bf = jax.random.uniform(kb, (1, out_dims), jnp.float32, -bound, bound)
    params["final"] = (wf, bf)
    return params


# ---------------------------------------------------------------------------
# one-time preparation: pad + cast parameters (runs OUTSIDE jit, once)
# ---------------------------------------------------------------------------
def prepare_params(params):
    """Returns (flat_arrays, hidden_dims).  flat = (w0,vec0, w1,vec1, ..., wf, bf)."""
    hidden_layers = params["hidden"]
    wf, bf = params["final"]
    hidden_dims = hidden_layers[0][0].shape[1]
    p_h = _round_up(hidden_dims, 128)

    flat = []
    for li, (w, b, gamma, beta) in enumerate(hidden_layers):
        rows = w.shape[0] if li == 0 else p_h     # first layer keeps true in_dims
        w_p = _pad2(w, rows, p_h).astype(jnp.bfloat16)
        vec = jnp.concatenate(
            [_pad2(b, 1, p_h), _pad2(gamma, 1, p_h), _pad2(beta, 1, p_h)], axis=0
        )  # (3, p_h) f32; padded gamma cols = 0 kills LN leakage
        flat += [w_p, vec]

    out_dims = wf.shape[1]
    flat += [_pad2(wf, p_h, out_dims).astype(jnp.bfloat16), bf.astype(jnp.float32)]
    return tuple(flat), int(hidden_dims)


# ---------------------------------------------------------------------------
# forward
# ---------------------------------------------------------------------------
@functools.partial(jax.jit, static_argnames=("hidden_dims",))
def mlp_forward(x, flat_params, *, hidden_dims):
    batch, in_dims = x.shape
    num_layers = (len(flat_params) - 2) // 2
    p_h = flat_params[0].shape[1]
    out_dims = flat_params[-2].shape[1]

    # ---- balanced batch tiling (rows are multiples of 8, tiles balanced) ----
    pb8 = _round_up(batch, 8)
    cap = 1024                                     # per-step rows; few MiB VMEM
    steps = max(1, pl.cdiv(pb8, cap))
    if pb8 >= 1024:                                # big enough: feed both v7x TCs
        steps = max(steps, 2)
        if steps % 2:
            steps += 1
    tb = _round_up(pl.cdiv(pb8, steps), 8)
    pb = tb * steps

    x = x.astype(jnp.float32)
    if pb != batch:                                # row padding only; no feature pad
        x = jnp.pad(x, ((0, pb - batch), (0, 0)))

    # ---- specs: x/out pipelined over batch, weights resident ----
    in_specs = [pl.BlockSpec((tb, in_dims), lambda i: (i, 0))]
    for l in range(num_layers):
        w_shape = flat_params[2 * l].shape
        in_specs.append(pl.BlockSpec(w_shape, lambda i: (0, 0)))   # resident weights
        in_specs.append(pl.BlockSpec((3, p_h), lambda i: (0, 0)))  # packed b/gamma/beta
    in_specs.append(pl.BlockSpec((p_h, out_dims), lambda i: (0, 0)))
    in_specs.append(pl.BlockSpec((1, out_dims), lambda i: (0, 0)))

    # ---- explicit VMEM budget (footprint + headroom, <= v7x 64 MiB ceiling) ----
    weight_bytes = sum(int(a.size) * a.dtype.itemsize for a in flat_params)
    act_bytes = 2 * tb * (in_dims + out_dims) * 4          # double-buffered x/out
    inter_bytes = 8 * tb * p_h * 4                          # f32 LN intermediates
    vmem_limit = 2 * weight_bytes + act_bytes + inter_bytes + (4 << 20)
    vmem_limit = int(min(64 << 20, max(vmem_limit, 16 << 20)))

    out = pl.pallas_call(
        _make_mlp_kernel(num_layers, hidden_dims, p_h),
        out_shape=jax.ShapeDtypeStruct((pb, out_dims), jnp.float32),
        grid=(steps,),
        in_specs=in_specs,
        out_specs=pl.BlockSpec((tb, out_dims), lambda i: (i, 0)),
        compiler_params=pltpu.CompilerParams(
            dimension_semantics=("parallel",),
            vmem_limit_bytes=vmem_limit,
        ),
    )(x, *flat_params)

    if pb != batch:
        out = out[:batch]
    return out


# ---------------------------------------------------------------------------
# pure-JAX reference of the PyTorch forward (mirrors bf16 MXU operand precision)
# ---------------------------------------------------------------------------
def mlp_reference(x, params):
    h = x.astype(jnp.float32)
    for (w, b, gamma, beta) in params["hidden"]:
        z = jnp.dot(h.astype(jnp.bfloat16), w.astype(jnp.bfloat16),
                    preferred_element_type=jnp.float32) + b
        mean = jnp.mean(z, axis=-1, keepdims=True)
        var = jnp.mean((z - mean) ** 2, axis=-1, keepdims=True)
        z = (z - mean) * jax.lax.rsqrt(var + LN_EPS) * gamma + beta
        h = jnp.maximum(z, 0.0)
    wf, bf = params["final"]
    return jnp.dot(h.astype(jnp.bfloat16), wf.astype(jnp.bfloat16),
                   preferred_element_type=jnp.float32) + bf


# ---------------------------------------------------------------------------
if __name__ == "__main__":
    key = jax.random.PRNGKey(0)

    ok = True
    for (batch, in_dims, hidden_dims, out_dims, layers) in [
        (8, 16, 32, 8, 1),      # small HSR-style config
        (20, 16, 512, 8, 2),    # PyTorch-default hidden width, multi-layer, ragged batch
    ]:
        key, kx, kp = jax.random.split(key, 3)
        x = jax.random.normal(kx, (batch, in_dims), jnp.float32)
        params = init_mlp_params(kp, in_dims, out_dims, hidden_dims, layers)
        flat_params, h_dims = prepare_params(params)   # pad + bf16-cast ONCE

        out = jax.block_until_ready(mlp_forward(x, flat_params, hidden_dims=h_dims))
        ref = mlp_reference(x, params)

        ok &= out.shape == (batch, out_dims)
        ok &= bool(jnp.allclose(out, ref, atol=1e-2, rtol=1e-2))

    assert ok
    print("KERNEL_OK")
</pallas_src>

<mosaic_0001>
module attributes {stable_mosaic.version = 11 : i64} {
  func.func @kernel(%arg0: i32, %arg1: memref<8x16xf32, #tpu.memory_space<vmem>>, %arg2: memref<16x128xbf16, #tpu.memory_space<vmem>>, %arg3: memref<3x128xf32, #tpu.memory_space<vmem>>, %arg4: memref<128x8xbf16, #tpu.memory_space<vmem>>, %arg5: memref<1x8xf32, #tpu.memory_space<vmem>>, %arg6: memref<8x8xf32, #tpu.memory_space<vmem>>) attributes {dimension_semantics = [#tpu.dimension_semantics<parallel>], iteration_bounds = array<i64: 1>, scalar_prefetch = 0 : i64, scratch_operands = 0 : i64, tpu.core_type = #tpu.core_type<tc>, window_params = [{transform_indices = @transform_0, window_bounds = array<i64: 8, 16>}, {pipeline_mode = #tpu.pipeline_mode<synchronous>, transform_indices = @transform_1, window_bounds = array<i64: 16, 128>}, {pipeline_mode = #tpu.pipeline_mode<synchronous>, transform_indices = @transform_2, window_bounds = array<i64: 3, 128>}, {pipeline_mode = #tpu.pipeline_mode<synchronous>, transform_indices = @transform_3, window_bounds = array<i64: 128, 8>}, {pipeline_mode = #tpu.pipeline_mode<synchronous>, transform_indices = @transform_4, window_bounds = array<i64: 1, 8>}, {transform_indices = @transform_5, window_bounds = array<i64: 8, 8>}]} {
    %c0 = arith.constant 0 : index
    %c0_0 = arith.constant 0 : index
    %0 = vector.load %arg1[%c0, %c0_0] : memref<8x16xf32, #tpu.memory_space<vmem>>, vector<8x16xf32>
    %1 = arith.truncf %0 : vector<8x16xf32> to vector<8x16xbf16>
    %c0_1 = arith.constant 0 : index
    %c0_2 = arith.constant 0 : index
    %2 = vector.load %arg2[%c0_1, %c0_2] : memref<16x128xbf16, #tpu.memory_space<vmem>>, vector<16x128xbf16>
    %cst = arith.constant dense<0.000000e+00> : vector<8x128xf32>
    %3 = tpu.matmul %1, %2, %cst {dimension_numbers = #tpu.dot_dimension_numbers<[1], [0], [0], [1], [0, 0, 1, 1], [], []>} : vector<8x16xbf16>, vector<16x128xbf16>, vector<8x128xf32> -> vector<8x128xf32>
    %c0_3 = arith.constant 0 : index
    %c0_4 = arith.constant 0 : index
    %4 = vector.load %arg3[%c0_3, %c0_4] : memref<3x128xf32, #tpu.memory_space<vmem>>, vector<1x128xf32>
    %5 = vector.broadcast %4 : vector<1x128xf32> to vector<8x128xf32>
    %6 = arith.addf %3, %5 : vector<8x128xf32>
    %cst_5 = arith.constant dense<0.000000e+00> : vector<8xf32>
    %7 = vector.multi_reduction <add>, %6, %cst_5 [1] : vector<8x128xf32> to vector<8xf32>
    %8 = vector.shape_cast %7 : vector<8xf32> to vector<8x1xf32>
    %cst_6 = arith.constant 3.125000e-02 : f32
    %9 = vector.broadcast %cst_6 : f32 to vector<8x1xf32>
    %10 = arith.mulf %8, %9 : vector<8x1xf32>
    %11 = vector.broadcast %10 : vector<8x1xf32> to vector<8x128xf32>
    %12 = arith.subf %6, %11 : vector<8x128xf32>
    %13 = arith.mulf %12, %12 : vector<8x128xf32>
    %cst_7 = arith.constant dense<0.000000e+00> : vector<8xf32>
    %14 = vector.multi_reduction <add>, %13, %cst_7 [1] : vector<8x128xf32> to vector<8xf32>
    %15 = vector.shape_cast %14 : vector<8xf32> to vector<8x1xf32>
    %cst_8 = arith.constant 3.125000e-02 : f32
    %16 = vector.broadcast %cst_8 : f32 to vector<8x1xf32>
    %17 = arith.mulf %15, %16 : vector<8x1xf32>
    %18 = arith.mulf %10, %10 : vector<8x1xf32>
    %cst_9 = arith.constant 3.000000e+00 : f32
    %19 = vector.broadcast %cst_9 : f32 to vector<8x1xf32>
    %20 = arith.mulf %19, %18 : vector<8x1xf32>
    %21 = arith.subf %17, %20 : vector<8x1xf32>
    %cst_10 = arith.constant 9.99999974E-6 : f32
    %22 = vector.broadcast %cst_10 : f32 to vector<8x1xf32>
    %23 = arith.addf %21, %22 : vector<8x1xf32>
    %24 = math.rsqrt %23 : vector<8x1xf32>
    %25 = vector.broadcast %24 : vector<8x1xf32> to vector<8x128xf32>
    %26 = arith.mulf %12, %25 : vector<8x128xf32>
    %c1 = arith.constant 1 : index
    %c0_11 = arith.constant 0 : index
    %27 = vector.load %arg3[%c1, %c0_11] : memref<3x128xf32, #tpu.memory_space<vmem>>, vector<1x128xf32>
    %28 = vector.broadcast %27 : vector<1x128xf32> to vector<8x128xf32>
    %29 = arith.mulf %26, %28 : vector<8x128xf32>
    %c2 = arith.constant 2 : index
    %c0_12 = arith.constant 0 : index
    %30 = vector.load %arg3[%c2, %c0_12] : memref<3x128xf32, #tpu.memory_space<vmem>>, vector<1x128xf32>
    %31 = vector.broadcast %30 : vector<1x128xf32> to vector<8x128xf32>
    %32 = arith.addf %29, %31 : vector<8x128xf32>
    %cst_13 = arith.constant 0.000000e+00 : f32
    %33 = vector.broadcast %cst_13 : f32 to vector<8x128xf32>
    %34 = arith.maximumf %32, %33 : vector<8x128xf32>
    %35 = arith.truncf %34 : vector<8x128xf32> to vector<8x128xbf16>
    %c0_14 = arith.constant 0 : index
    %c0_15 = arith.constant 0 : index
    %36 = vector.load %arg4[%c0_14, %c0_15] : memref<128x8xbf16, #tpu.memory_space<vmem>>, vector<128x8xbf16>
    %cst_16 = arith.constant dense<0.000000e+00> : vector<8x8xf32>
    %37 = tpu.matmul %35, %36, %cst_16 {dimension_numbers = #tpu.dot_dimension_numbers<[1], [0], [0], [1], [0, 0, 1, 1], [], []>} : vector<8x128xbf16>, vector<128x8xbf16>, vector<8x8xf32> -> vector<8x8xf32>
    %c0_17 = arith.constant 0 : index
    %c0_18 = arith.constant 0 : index
    %38 = vector.load %arg5[%c0_17, %c0_18] : memref<1x8xf32, #tpu.memory_space<vmem>>, vector<1x8xf32>
    %39 = vector.broadcast %38 : vector<1x8xf32> to vector<8x8xf32>
    %40 = arith.addf %37, %39 : vector<8x8xf32>
    %c0_19 = arith.constant 0 : index
    %c0_20 = arith.constant 0 : index
    %41 = vector.load %arg6[%c0_19, %c0_20] : memref<8x8xf32, #tpu.memory_space<vmem>>, vector<8x8xf32>
    tpu.vector_store %arg6[%c0_19, %c0_20], %40 {strides = array<i32>} : memref<8x8xf32, #tpu.memory_space<vmem>>, vector<8x8xf32>,
    return
  }
  func.func @transform_0(%arg0: i32) -> (i32, i32) {
    %c0_i32 = arith.constant 0 : i32
    %c0_i32_0 = arith.constant 0 : i32
    return %arg0, %c0_i32 : i32, i32
  }
  func.func @transform_1(%arg0: i32) -> (i32, i32) {
    %c0_i32 = arith.constant 0 : i32
    %c0_i32_0 = arith.constant 0 : i32
    %c0_i32_1 = arith.constant 0 : i32
    return %c0_i32, %c0_i32_0 : i32, i32
  }
  func.func @transform_2(%arg0: i32) -> (i32, i32) {
    %c0_i32 = arith.constant 0 : i32
    %c0_i32_0 = arith.constant 0 : i32
    %c0_i32_1 = arith.constant 0 : i32
    return %c0_i32, %c0_i32_0 : i32, i32
  }
  func.func @transform_3(%arg0: i32) -> (i32, i32) {
    %c0_i32 = arith.constant 0 : i32
    %c0_i32_0 = arith.constant 0 : i32
    %c0_i32_1 = arith.constant 0 : i32
    return %c0_i32, %c0_i32_0 : i32, i32
  }
  func.func @transform_4(%arg0: i32) -> (i32, i32) {
    %c0_i32 = arith.constant 0 : i32
    %c0_i32_0 = arith.constant 0 : i32
    %c0_i32_1 = arith.constant 0 : i32
    return %c0_i32, %c0_i32_0 : i32, i32
  }
  func.func @transform_5(%arg0: i32) -> (i32, i32) {
    %c0_i32 = arith.constant 0 : i32
    %c0_i32_0 = arith.constant 0 : i32
    return %arg0, %c0_i32 : i32, i32
  }
}

</mosaic_0001>

<llo_original>
// kernel: mlp_forward.1
$region0: #{mlp_forward.1}
  #allocation0 [shape = 'u32[]', space=smem, size = 0x4, offset = 0x4, fixed_abs, tag = 'smem constant byte address 0x4 - core index']
  #allocation1 [shape = 'u32[72,128]{1,0:T(1,128)}', space=vmem, size = 0x9000, scoped, tag = 'internal scratch']
  %s0 = inlined_call_operand.vmem [shape: f32[8,16], index: 0, kind: input, shape index: {}]
  %s1 = inlined_call_operand.vmem [shape: bf16[16,128], index: 1, kind: input, shape index: {}]
  %s2 = inlined_call_operand.vmem [shape: f32[3,128], index: 2, kind: input, shape index: {}]
  %s3 = inlined_call_operand.vmem [shape: bf16[128,8], index: 3, kind: input, shape index: {}]
  %s4 = inlined_call_operand.vmem [shape: f32[1,8], index: 4, kind: input, shape index: {}]
  %s5 = inlined_call_operand.hbm [shape: f32[8,8], index: 5, kind: output, shape index: {}]
  %s6 = sld [smem:[#allocation0]]
  $region30: #{mlp_forward.1} parent=0
    _
  %s8 = ssub.s32 1, %s6
  %s9 = scalar_select 0, %s8, %s6
  $region1: #{mlp_forward.1} parent=0
    #allocation2 [shape = 'u8[4096]{0}', space=vmem, size = 0x1000, scoped, tag = 'output window, operand 0, single buffered']
    #allocation3 [shape = 's32[1]{0}', space=sflag, size = 0x4, scoped, tag = 'scoped memory for mlp_forward.1']
    %10 = vsyncpa [#allocation3], 0
    // Predicated region
    $region2: #{mlp_forward.1} parent=1 // pred_check
      _
    $region3: #{mlp_forward.1} parent=1 // pred_check_branch
      %12 = sbr.rel (0) target = $region5
    $region4: #{mlp_forward.1} parent=1 // pred_region
      _
    $region5: #{mlp_forward.1} parent=1 // pred_fallthru
      _
    // Predicated region
    $region6: #{mlp_forward.1} parent=1 // pred_check
      _
    $region7: #{mlp_forward.1} parent=1 // pred_check_branch
      %14 = sbr.rel (0) target = $region9
    $region8: #{mlp_forward.1} parent=1 // pred_region
      _
    $region9: #{mlp_forward.1} parent=1 // pred_fallthru
      _
    // Predicated region
    $region10: #{mlp_forward.1} parent=1 // pred_check
      _
    $region11: #{mlp_forward.1} parent=1 // pred_check_branch
      %16 = sbr.rel (0) target = $region13
    $region12: #{mlp_forward.1} parent=1 // pred_region
      _
    $region13: #{mlp_forward.1} parent=1 // pred_fallthru
      _
    // Predicated region
    $region14: #{mlp_forward.1} parent=1 // pred_check
      _
    $region15: #{mlp_forward.1} parent=1 // pred_check_branch
      %18 = sbr.rel (0) target = $region17
    $region16: #{mlp_forward.1} parent=1 // pred_region
      _
    $region17: #{mlp_forward.1} parent=1 // pred_fallthru
      _
    // Predicated region
    $region18: #{mlp_forward.1} parent=1 // pred_check
      _
    $region19: #{mlp_forward.1} parent=1 // pred_check_branch
      %20 = sbr.rel (0) target = $region21
    $region20: #{mlp_forward.1} parent=1 // pred_region
      _
    $region21: #{mlp_forward.1} parent=1 // pred_fallthru
      _
    %v22 = vld [vmem:[%s0] sm:$0xff]
    %v23 = vpack.c.bf16 %v22, %v22
    %v24 = vld [vmem:[%s1] sm:$0xf]
    %v25 = vld [vmem:[%s1 + $0x4] sm:$0xf]
    %v26 = vld [vmem:[%s2] sm:$0x1]
    %v27 = vperm.slane %v26, 0
    %v30 = vunpack.c.l.b16 %v24
    %v31 = vunpack.c.l.b16 %v25
    %v32 = vpack.c.b16 %v31, %v30
    %vm34 = vcmask 130048
    %v36 = vsel %vm34, %v23, 0
    %38 = vmatpush.bf16.msra.mxu0 0
    %39 = vmatpush.bf16.msra.mxu0 0
    %40 = vmatpush.bf16.msra.mxu0 0
    %41 = vmatpush.bf16.msra.mxu0 0
    %42 = vmatpush.bf16.msra.mxu0 0
    %43 = vmatpush.bf16.msra.mxu0 0
    %44 = vmatpush.bf16.msra.mxu0 0
    %45 = vmatpush.bf16.msra.mxu0 %v32
    %46 = vmatmul.bf16.gmra.mxu0 %v36
    %v47 = vpop.f32.mrf.mxu0
    %v48 = vadd.f32 %v27, %v47
    %v49 = vpop.f32.mrf.mxu0
    %50 = vdwg.mxu0
    %51 = vadd.xlane.f32.xlu0 %v48
    %v52 = vpop.xlane.xlu0 %51
    %v53 = vmul.f32 %v52, 0.03125
    %v54 = vsub.f32 %v48, %v53
    %v55 = vmul.f32 %v54, %v54
    %56 = vadd.xlane.f32.xlu0 %v55
    %v57 = vpop.xlane.xlu0 %56
    %v58 = vmul.f32 %v57, 0.03125
    %v59 = vmul.f32 %v53, %v53
    %v60 = vmul.f32 %v59, 3.0
    %v61 = vsub.f32 %v58, %v60
    %v62 = vadd.f32 %v61, 1e-05
    %v63 = vrsqrt.pop %v62
    %v64 = vmul.f32 %v63, %v62
    %v65 = vmul.f32 %v64, %v63
    %v66 = vmul.f32 0.5, %v65
    %v67 = vsub.f32 1.5, %v66
    %v68 = vmul.f32 %v63, %v67
    %vm69 = vweird.f32 %v62
    %vm70 = vweird.f32 %v63
    %vm71 = vmor %vm69, %vm70
    %v72 = vsel %vm71, %v63, %v68
    %v73 = vmul.f32 %v54, %v72
    %v74 = vld [vmem:[%s2 + $0x1] sm:$0x1]
    %v75 = vperm.slane %v74, 0
    %v76 = vmul.f32 %v73, %v75
    %v77 = vld [vmem:[%s2 + $0x2] sm:$0x1]
    %v78 = vperm.slane %v77, 0
    %v79 = vadd.f32 %v76, %v78
    %v80 = vmax.f32 %v79, 0.0
    %v81 = vpack.c.bf16 %v80, %v80
    %v82 = vld [vmem:[%s3] sm:$0xf]
    %v83 = vld [vmem:[%s3 + $0x4] sm:$0xf]
    %v84 = vld [vmem:[%s3 + $0x8] sm:$0xf]
    %v85 = vld [vmem:[%s3 + $0xc] sm:$0xf]
    %v86 = vld [vmem:[%s3 + $0x10] sm:$0xf]
    %v87 = vld [vmem:[%s3 + $0x14] sm:$0xf]
    %v88 = vld [vmem:[%s3 + $0x18] sm:$0xf]
    %v89 = vld [vmem:[%s3 + $0x1c] sm:$0xf]
    %v90 = vld [vmem:[%s3 + $0x20] sm:$0xf]
    %v91 = vld [vmem:[%s3 + $0x24] sm:$0xf]
    %v92 = vld [vmem:[%s3 + $0x28] sm:$0xf]
    %v93 = vld [vmem:[%s3 + $0x2c] sm:$0xf]
    %v94 = vld [vmem:[%s3 + $0x30] sm:$0xf]
    %v95 = vld [vmem:[%s3 + $0x34] sm:$0xf]
    %v96 = vld [vmem:[%s3 + $0x38] sm:$0xf]
    %v97 = vld [vmem:[%s3 + $0x3c] sm:$0xf]
    %v98 = vld [vmem:[%s4] sm:$0x1]
    %v100 = vperm.slane %v98, 0
    %v118 = vunpack.c.l.b16 %v82
    %v119 = vunpack.c.l.b16 %v83
    %v120 = vunpack.c.l.b16 %v84
    %v121 = vunpack.c.l.b16 %v85
    %v122 = vunpack.c.l.b16 %v86
    %v123 = vunpack.c.l.b16 %v87
    %v124 = vunpack.c.l.b16 %v88
    %v125 = vunpack.c.l.b16 %v89
    %v126 = vunpack.c.l.b16 %v90
    %v127 = vunpack.c.l.b16 %v91
    %v128 = vunpack.c.l.b16 %v92
    %v129 = vunpack.c.l.b16 %v93
    %v130 = vunpack.c.l.b16 %v94
    %v131 = vunpack.c.l.b16 %v95
    %v132 = vunpack.c.l.b16 %v96
    %v133 = vunpack.c.l.b16 %v97
    %v134 = vpack.c.b16 %v119, %v118
    %v135 = vpack.c.b16 %v121, %v120
    %v136 = vpack.c.b16 %v123, %v122
    %v137 = vpack.c.b16 %v125, %v124
    %v138 = vpack.c.b16 %v127, %v126
    %v139 = vpack.c.b16 %v129, %v128
    %v140 = vpack.c.b16 %v131, %v130
    %v141 = vpack.c.b16 %v133, %v132
    %150 = vmatpush.bf16.msra.mxu0 %v141
    %151 = vmatpush.bf16.msra.mxu0 %v140
    %152 = vmatpush.bf16.msra.mxu0 %v139
    %153 = vmatpush.bf16.msra.mxu0 %v138
    %154 = vmatpush.bf16.msra.mxu0 %v137
    %155 = vmatpush.bf16.msra.mxu0 %v136
    %156 = vmatpush.bf16.msra.mxu0 %v135
    %157 = vmatpush.bf16.msra.mxu0 %v134
    %158 = vmatmul.bf16.gmra.mxu0 %v81
    %v159 = vpop.f32.mrf.mxu0
    %v160 = vadd.f32 %v100, %v159
    %v161 = vpop.f32.mrf.mxu0
    %162 = vdwg.mxu0
    %vm163 = vcmask 64512
    %164 = vst.msk [vmem:[#allocation2] sm:$0xff] %vm163, %v160
    // Predicated region
    $region22: #{mlp_forward.1} parent=1 // pred_check
      _
    $region23: #{mlp_forward.1} parent=1 // pred_check_branch
      %166 = sbr.rel (0) target = $region25
    $region24: #{mlp_forward.1} parent=1 // pred_region
      %168 = vsyncadd [#allocation3], 0
      %s170 = sshll.u32 [#allocation2], 4
      %s171 = int_to_ptr.vmem [resolvable:$true] %s170
      %s172 = sshll.u32 %s5, 4
      %s173 = int_to_ptr.hbm [resolvable:$true] %s172
      %175 = dma.vmem_to_hbm [thread:$0]  %s171, 128, %s173, [#allocation3]
    $region25: #{mlp_forward.1} parent=1 // pred_fallthru
      _
    // Predicated region
    $region26: #{mlp_forward.1} parent=1 // pred_check
      _
    $region27: #{mlp_forward.1} parent=1 // pred_check_branch
      %177 = sbr.rel (0) target = $region29
    $region28: #{mlp_forward.1} parent=1 // pred_region
      %179 = dma.done [#allocation3], 128
    $region29: #{mlp_forward.1} parent=1 // pred_fallthru
      _
    %180 = vsyncpa [#allocation3], 1

</llo_original>
